<compile_context>
chip_gen: v7x
topology: tpu7x:2x2x1
jax: 0.10.0
libtpu: 0.0.40
codegen_flags: <defaults>
</compile_context>

<pallas_src>
import numpy as np
import jax
import jax.numpy as jnp
from jax.experimental import pallas as pl
from jax.experimental.pallas import tpu as pltpu

TIME_DIM = 4
CS_DIM = 8
OBS_REST = 5            # observe[..., 2:] width
OBS_FEAT = 7            # total observe feature width
HIDDEN = 64

_MAX_TM = 4096          # batch-lane tile cap; inside default scoped VMEM everywhere


def _round_up(x, m):
    return ((x + m - 1) // m) * m


def _make_actor_kernel(t_len, n_cs):
    k_emb = t_len + n_cs

    def kernel(obs_ref, wcomb_ref, wemb_ref, w2_ref, b2_ref, w3_ref, b3_ref,
               o_ref):
        tm = obs_ref.shape[0]

        # One MXU "A @ B^T" contraction over the 7-wide feature axis does two
        # jobs at once (no explicit transpose of the obs tile needed):
        #   rows 0..63  : rest-features' contribution to layer 1
        #   rows 64..65 : time / cs indices moved onto the lane axis
        tmp = jax.lax.dot_general(
            wcomb_ref[...], obs_ref[...],
            (((1,), (1,)), ((), ())),
            preferred_element_type=jnp.float32)              # (72, TM)

        # Indices are integer-valued floats; the selector matmul reproduces
        # them exactly.  +1e-3 guards the int truncation against rounding
        # while keeping torch's `.long()` (truncate) semantics.
        t_idx = (tmp[HIDDEN:HIDDEN + 1, :] + 1e-3).astype(jnp.int32)      # (1, TM)
        c_idx = (tmp[HIDDEN + 1:HIDDEN + 2, :] + 1e-3).astype(jnp.int32)  # (1, TM)

        # Fused one-hot over [time ; cs]: compact orientation
        # (k_emb on sublanes, batch on lanes) -> single iota / compare / cast.
        row = jax.lax.broadcasted_iota(jnp.int32, (k_emb, tm), 0)
        tgt = jnp.where(row < t_len, t_idx, c_idx + t_len)   # (k_emb, TM)
        one_hot = (row == tgt).astype(jnp.float32)           # (k_emb, TM)

        # Layer 1: embedding tables + b1 pre-folded into wemb (wrapper);
        # rest-feature contribution comes from the combined matmul above.
        h1 = (jnp.dot(wemb_ref[...], one_hot,
                      preferred_element_type=jnp.float32)
              + tmp[0:HIDDEN, :])                            # (64, TM)
        h1 = jnp.maximum(h1, 0.0)

        # Layer 2.
        h2 = jnp.dot(w2_ref[...], h1,
                     preferred_element_type=jnp.float32) + b2_ref[...]
        h2 = jnp.maximum(h2, 0.0)                            # (64, TM)

        # Layer 3 (64 -> 1): VPU multiply + sublane reduce; lane-dense row.
        o_ref[...] = (jnp.sum(h2 * w3_ref[...], axis=0, keepdims=True)
                      + b3_ref[...])                         # (1, TM)

    return kernel


def prepare_params(params):
    """One-time parameter folding, hoisted out of the per-call hot path.

    * time/cs embedding tables folded into the layer-1 lookup weight,
    * b1 folded into the time block (exactly one time hit per one-hot column),
    * rest-feature weights + index-selector rows stacked into one (72, 7)
      weight used by the in-kernel A @ B^T contraction.
    """
    t_len = int(params["time_table"].shape[0])
    n_cs = int(params["cs_table"].shape[0])

    wemb = jnp.concatenate(
        [(params["time_table"] @ params["w1_t"] + params["b1"]).T,  # (64, T_LEN)
         (params["cs_table"] @ params["w1_c"]).T],                  # (64, N)
        axis=1).astype(jnp.float32)                                 # (64, T_LEN+N)

    # (HIDDEN + 8, 7): rows 0..63 rest-feature weights, 64/65 index selectors,
    # 66..71 zero padding (keeps the matmul output exactly sublane-tiled).
    wcomb = jnp.zeros((HIDDEN + 8, OBS_FEAT), jnp.float32)
    wcomb = wcomb.at[:HIDDEN, 2:].set(params["w1_o"].T)
    wcomb = wcomb.at[HIDDEN, 0].set(1.0)        # -> time index row
    wcomb = wcomb.at[HIDDEN + 1, 1].set(1.0)    # -> cs index row

    return {
        "t_len": t_len, "n_cs": n_cs,
        "wcomb": wcomb,                                   # (72, 7)
        "wemb": wemb,                                     # (64, T_LEN+N)
        "w2_t": params["w2"].T.astype(jnp.float32),       # (64, 64)
        "b2_t": params["b2"].T.astype(jnp.float32),       # (64, 1)
        "w3": params["w3"].astype(jnp.float32),           # (64, 1)
        "b3": params["b3"].astype(jnp.float32),           # (1, 1)
    }


def actor_forward(observe, prep):
    """observe: (..., 7) float -> actions: (..., 1) float32."""
    lead = observe.shape[:-1]
    feat = observe.shape[-1]
    M = int(np.prod(lead)) if lead else 1

    # Tile along the flattened batch axis (the kernel's lane axis).  Keep
    # G >= 2 whenever M > 128 (v7x megacore), then shrink the tile to the
    # padding-minimal multiple of 128 for that G.
    TM = max(128, min(_MAX_TM, _round_up(-(-M // 2), 128)))
    G = -(-M // TM)
    TM = min(TM, _round_up(-(-M // G), 128))
    M_pad = G * TM

    obs2d = observe.reshape(M, feat).astype(jnp.float32)
    if M_pad != M:
        # Zero rows -> index 0 / zero features: harmless, sliced off below.
        obs2d = jnp.pad(obs2d, ((0, M_pad - M), (0, 0)))

    def full(a):  # resident full-array weight block, constant index_map
        return pl.BlockSpec(a.shape, lambda i: (0, 0))

    out = pl.pallas_call(
        _make_actor_kernel(prep["t_len"], prep["n_cs"]),
        out_shape=jax.ShapeDtypeStruct((1, M_pad), jnp.float32),
        grid=(G,),
        in_specs=[
            pl.BlockSpec((TM, feat), lambda i: (i, 0)),    # obs tile, natural layout
            full(prep["wcomb"]), full(prep["wemb"]),
            full(prep["w2_t"]), full(prep["b2_t"]),
            full(prep["w3"]), full(prep["b3"]),
        ],
        out_specs=pl.BlockSpec((1, TM), lambda i: (0, i)), # lane-dense output row
        compiler_params=pltpu.CompilerParams(
            dimension_semantics=("parallel",)),
    )(obs2d, prep["wcomb"], prep["wemb"], prep["w2_t"], prep["b2_t"],
      prep["w3"], prep["b3"])

    return out[0, :M].reshape(*lead, 1)


def init_params(key, T_LEN, N):
    """Deterministic synthetic parameters matching the PyTorch module shapes."""
    ks = jax.random.split(key, 8)
    in_dim = TIME_DIM + CS_DIM + OBS_REST  # 17

    # Embedding tables: torch.rand -> uniform [0, 1)
    time_table = jax.random.uniform(ks[0], (T_LEN, TIME_DIM), jnp.float32)
    cs_table = jax.random.uniform(ks[1], (N, CS_DIM), jnp.float32)

    def linear(k, fan_in, fan_out):
        bound = 1.0 / np.sqrt(fan_in)
        kw, kb = jax.random.split(k)
        w = jax.random.uniform(kw, (fan_in, fan_out), jnp.float32, -bound, bound)
        b = jax.random.uniform(kb, (1, fan_out), jnp.float32, -bound, bound)
        return w, b

    w1, b1 = linear(ks[2], in_dim, HIDDEN)
    w2, b2 = linear(ks[3], HIDDEN, HIDDEN)
    w3, b3 = linear(ks[4], HIDDEN, 1)

    return {
        "time_table": time_table,
        "cs_table": cs_table,
        # W1 split row-wise to match concat order [time_emb, cs_emb, obs[...,2:]]
        "w1_t": w1[:TIME_DIM],
        "w1_c": w1[TIME_DIM:TIME_DIM + CS_DIM],
        "w1_o": w1[TIME_DIM + CS_DIM:],
        "b1": b1,
        "w2": w2, "b2": b2,
        "w3": w3, "b3": b3,
    }


def reference_forward(observe, params):
    """Pure-JAX reference mirroring the PyTorch forward."""
    t_idx = observe[..., 0].astype(jnp.int32)
    c_idx = observe[..., 1].astype(jnp.int32)
    te = params["time_table"][t_idx]
    ce = params["cs_table"][c_idx]
    x = jnp.concatenate([te, ce, observe[..., 2:]], axis=-1)
    w1 = jnp.concatenate([params["w1_t"], params["w1_c"], params["w1_o"]], axis=0)
    h = jnp.maximum(x @ w1 + params["b1"][0], 0.0)
    h = jnp.maximum(h @ params["w2"] + params["b2"][0], 0.0)
    return h @ params["w3"] + params["b3"][0]


if __name__ == "__main__":
    T_LEN = 24   # args.T_LEN
    N = 8        # args.N
    B, S = 2, 8  # observe is (B, S, 7)

    key = jax.random.PRNGKey(0)
    k_param, k_t, k_c, k_f = jax.random.split(key, 4)
    params = init_params(k_param, T_LEN, N)
    prep = prepare_params(params)          # one-time parameter folding (hoisted)

    time_idx = jax.random.randint(k_t, (B, S, 1), 0, T_LEN).astype(jnp.float32)
    cs_idx = jax.random.randint(k_c, (B, S, 1), 0, N).astype(jnp.float32)
    feats = jax.random.uniform(k_f, (B, S, OBS_REST), jnp.float32)
    observe = jnp.concatenate([time_idx, cs_idx, feats], axis=-1)  # (2, 8, 7)

    actions = actor_forward(observe, prep)
    actions = jax.block_until_ready(actions)

    ref = reference_forward(observe, params)
    # Folding the tables / b1 into layer-1 weights reassociates f32 sums,
    # still well within 1e-4.
    np.testing.assert_allclose(np.asarray(actions), np.asarray(ref),
                               rtol=1e-4, atol=1e-4)
    assert actions.shape == (B, S, 1)
    print("KERNEL_OK")
</pallas_src>

<mosaic_0001>
module attributes {stable_mosaic.version = 11 : i64} {
  func.func @kernel(%arg0: i32, %arg1: memref<128x7xf32, #tpu.memory_space<vmem>>, %arg2: memref<72x7xf32, #tpu.memory_space<vmem>>, %arg3: memref<64x32xf32, #tpu.memory_space<vmem>>, %arg4: memref<64x64xf32, #tpu.memory_space<vmem>>, %arg5: memref<64x1xf32, #tpu.memory_space<vmem>>, %arg6: memref<64x1xf32, #tpu.memory_space<vmem>>, %arg7: memref<1x1xf32, #tpu.memory_space<vmem>>, %arg8: memref<1x128xf32, #tpu.memory_space<vmem>>) attributes {dimension_semantics = [#tpu.dimension_semantics<parallel>], iteration_bounds = array<i64: 1>, scalar_prefetch = 0 : i64, scratch_operands = 0 : i64, tpu.core_type = #tpu.core_type<tc>, window_params = [{transform_indices = @transform_0, window_bounds = array<i64: 128, 7>}, {pipeline_mode = #tpu.pipeline_mode<synchronous>, transform_indices = @transform_1, window_bounds = array<i64: 72, 7>}, {pipeline_mode = #tpu.pipeline_mode<synchronous>, transform_indices = @transform_2, window_bounds = array<i64: 64, 32>}, {pipeline_mode = #tpu.pipeline_mode<synchronous>, transform_indices = @transform_3, window_bounds = array<i64: 64, 64>}, {pipeline_mode = #tpu.pipeline_mode<synchronous>, transform_indices = @transform_4, window_bounds = array<i64: 64, 1>}, {pipeline_mode = #tpu.pipeline_mode<synchronous>, transform_indices = @transform_5, window_bounds = array<i64: 64, 1>}, {pipeline_mode = #tpu.pipeline_mode<synchronous>, transform_indices = @transform_6, window_bounds = array<i64: 1, 1>}, {transform_indices = @transform_7, window_bounds = array<i64: 1, 128>}]} {
    %c0 = arith.constant 0 : index
    %c0_0 = arith.constant 0 : index
    %0 = vector.load %arg2[%c0, %c0_0] : memref<72x7xf32, #tpu.memory_space<vmem>>, vector<72x7xf32>
    %c0_1 = arith.constant 0 : index
    %c0_2 = arith.constant 0 : index
    %1 = vector.load %arg1[%c0_1, %c0_2] : memref<128x7xf32, #tpu.memory_space<vmem>>, vector<128x7xf32>
    %cst = arith.constant dense<0.000000e+00> : vector<72x128xf32>
    %2 = tpu.matmul %0, %1, %cst {dimension_numbers = #tpu.dot_dimension_numbers<[1], [1], [0], [0], [0, 0, 1, 0], [], []>} : vector<72x7xf32>, vector<128x7xf32>, vector<72x128xf32> -> vector<72x128xf32>
    %3 = vector.extract_strided_slice %2 {offsets = [64, 0], sizes = [1, 128], strides = [1, 1]} : vector<72x128xf32> to vector<1x128xf32>
    %cst_3 = arith.constant 1.000000e-03 : f32
    %4 = vector.broadcast %cst_3 : f32 to vector<1x128xf32>
    %5 = arith.addf %3, %4 : vector<1x128xf32>
    %6 = arith.fptosi %5 : vector<1x128xf32> to vector<1x128xi32>
    %7 = vector.extract_strided_slice %2 {offsets = [65, 0], sizes = [1, 128], strides = [1, 1]} : vector<72x128xf32> to vector<1x128xf32>
    %cst_4 = arith.constant 1.000000e-03 : f32
    %8 = vector.broadcast %cst_4 : f32 to vector<1x128xf32>
    %9 = arith.addf %7, %8 : vector<1x128xf32>
    %10 = arith.fptosi %9 : vector<1x128xf32> to vector<1x128xi32>
    %11 = tpu.iota {dimensions = array<i32: 0>} : vector<32x128xi32>
    %c24_i32 = arith.constant 24 : i32
    %12 = vector.broadcast %c24_i32 : i32 to vector<32x128xi32>
    %13 = arith.cmpi slt, %11, %12 : vector<32x128xi32>
    %c24_i32_5 = arith.constant 24 : i32
    %14 = vector.broadcast %c24_i32_5 : i32 to vector<1x128xi32>
    %15 = arith.addi %10, %14 : vector<1x128xi32>
    %16 = vector.shape_cast %6 : vector<1x128xi32> to vector<1x128xi32>
    %17 = vector.broadcast %16 : vector<1x128xi32> to vector<32x128xi32>
    %18 = vector.shape_cast %15 : vector<1x128xi32> to vector<1x128xi32>
    %19 = vector.broadcast %18 : vector<1x128xi32> to vector<32x128xi32>
    %20 = arith.select %13, %17, %19 : vector<32x128xi1>, vector<32x128xi32>
    %21 = arith.cmpi eq, %11, %20 : vector<32x128xi32>
    %22 = arith.extui %21 : vector<32x128xi1> to vector<32x128xi32>
    %23 = arith.sitofp %22 : vector<32x128xi32> to vector<32x128xf32>
    %c0_6 = arith.constant 0 : index
    %c0_7 = arith.constant 0 : index
    %24 = vector.load %arg3[%c0_6, %c0_7] : memref<64x32xf32, #tpu.memory_space<vmem>>, vector<64x32xf32>
    %cst_8 = arith.constant dense<0.000000e+00> : vector<64x128xf32>
    %25 = tpu.matmul %24, %23, %cst_8 {dimension_numbers = #tpu.dot_dimension_numbers<[1], [0], [0], [1], [0, 0, 1, 1], [], []>} : vector<64x32xf32>, vector<32x128xf32>, vector<64x128xf32> -> vector<64x128xf32>
    %26 = vector.extract_strided_slice %2 {offsets = [0, 0], sizes = [64, 128], strides = [1, 1]} : vector<72x128xf32> to vector<64x128xf32>
    %27 = arith.addf %25, %26 : vector<64x128xf32>
    %cst_9 = arith.constant 0.000000e+00 : f32
    %28 = vector.broadcast %cst_9 : f32 to vector<64x128xf32>
    %29 = arith.maximumf %27, %28 : vector<64x128xf32>
    %c0_10 = arith.constant 0 : index
    %c0_11 = arith.constant 0 : index
    %30 = vector.load %arg4[%c0_10, %c0_11] : memref<64x64xf32, #tpu.memory_space<vmem>>, vector<64x64xf32>
    %cst_12 = arith.constant dense<0.000000e+00> : vector<64x128xf32>
    %31 = tpu.matmul %30, %29, %cst_12 {dimension_numbers = #tpu.dot_dimension_numbers<[1], [0], [0], [1], [0, 0, 1, 1], [], []>} : vector<64x64xf32>, vector<64x128xf32>, vector<64x128xf32> -> vector<64x128xf32>
    %c0_13 = arith.constant 0 : index
    %c0_14 = arith.constant 0 : index
    %32 = vector.load %arg5[%c0_13, %c0_14] : memref<64x1xf32, #tpu.memory_space<vmem>>, vector<64x1xf32>
    %33 = vector.broadcast %32 : vector<64x1xf32> to vector<64x128xf32>
    %34 = arith.addf %31, %33 : vector<64x128xf32>
    %cst_15 = arith.constant 0.000000e+00 : f32
    %35 = vector.broadcast %cst_15 : f32 to vector<64x128xf32>
    %36 = arith.maximumf %34, %35 : vector<64x128xf32>
    %c0_16 = arith.constant 0 : index
    %c0_17 = arith.constant 0 : index
    %37 = vector.load %arg6[%c0_16, %c0_17] : memref<64x1xf32, #tpu.memory_space<vmem>>, vector<64x1xf32>
    %38 = vector.broadcast %37 : vector<64x1xf32> to vector<64x128xf32>
    %39 = arith.mulf %36, %38 : vector<64x128xf32>
    %cst_18 = arith.constant dense<0.000000e+00> : vector<128xf32>
    %40 = vector.multi_reduction <add>, %39, %cst_18 [0] : vector<64x128xf32> to vector<128xf32>
    %41 = vector.shape_cast %40 : vector<128xf32> to vector<1x128xf32>
    %c0_19 = arith.constant 0 : index
    %c0_20 = arith.constant 0 : index
    %42 = vector.load %arg7[%c0_19, %c0_20] : memref<1x1xf32, #tpu.memory_space<vmem>>, vector<1x1xf32>
    %43 = vector.broadcast %42 : vector<1x1xf32> to vector<1x128xf32>
    %44 = arith.addf %41, %43 : vector<1x128xf32>
    %c0_21 = arith.constant 0 : index
    %c0_22 = arith.constant 0 : index
    %45 = vector.load %arg8[%c0_21, %c0_22] : memref<1x128xf32, #tpu.memory_space<vmem>>, vector<1x128xf32>
    tpu.vector_store %arg8[%c0_21, %c0_22], %44 {strides = array<i32>} : memref<1x128xf32, #tpu.memory_space<vmem>>, vector<1x128xf32>,
    return
  }
  func.func @transform_0(%arg0: i32) -> (i32, i32) {
    %c0_i32 = arith.constant 0 : i32
    %c0_i32_0 = arith.constant 0 : i32
    return %arg0, %c0_i32 : i32, i32
  }
  func.func @transform_1(%arg0: i32) -> (i32, i32) {
    %c0_i32 = arith.constant 0 : i32
    %c0_i32_0 = arith.constant 0 : i32
    %c0_i32_1 = arith.constant 0 : i32
    return %c0_i32, %c0_i32_0 : i32, i32
  }
  func.func @transform_2(%arg0: i32) -> (i32, i32) {
    %c0_i32 = arith.constant 0 : i32
    %c0_i32_0 = arith.constant 0 : i32
    %c0_i32_1 = arith.constant 0 : i32
    return %c0_i32, %c0_i32_0 : i32, i32
  }
  func.func @transform_3(%arg0: i32) -> (i32, i32) {
    %c0_i32 = arith.constant 0 : i32
    %c0_i32_0 = arith.constant 0 : i32
    %c0_i32_1 = arith.constant 0 : i32
    return %c0_i32, %c0_i32_0 : i32, i32
  }
  func.func @transform_4(%arg0: i32) -> (i32, i32) {
    %c0_i32 = arith.constant 0 : i32
    %c0_i32_0 = arith.constant 0 : i32
    %c0_i32_1 = arith.constant 0 : i32
    return %c0_i32, %c0_i32_0 : i32, i32
  }
  func.func @transform_5(%arg0: i32) -> (i32, i32) {
    %c0_i32 = arith.constant 0 : i32
    %c0_i32_0 = arith.constant 0 : i32
    %c0_i32_1 = arith.constant 0 : i32
    return %c0_i32, %c0_i32_0 : i32, i32
  }
  func.func @transform_6(%arg0: i32) -> (i32, i32) {
    %c0_i32 = arith.constant 0 : i32
    %c0_i32_0 = arith.constant 0 : i32
    %c0_i32_1 = arith.constant 0 : i32
    return %c0_i32, %c0_i32_0 : i32, i32
  }
  func.func @transform_7(%arg0: i32) -> (i32, i32) {
    %c0_i32 = arith.constant 0 : i32
    %c0_i32_0 = arith.constant 0 : i32
    return %c0_i32, %arg0 : i32, i32
  }
}

</mosaic_0001>

<llo_original>
// kernel: tpu_custom_call.1
$region0: #{tpu_custom_call.1}
  #allocation0 [shape = 'u32[]', space=smem, size = 0x4, offset = 0x4, fixed_abs, tag = 'smem constant byte address 0x4 - core index']
  #allocation1 [shape = 'u32[144,128]{1,0:T(1,128)}', space=vmem, size = 0x12000, scoped, tag = 'internal scratch']
  #allocation2 [shape = 'f32[1,1]{1,0:T(1,128)S(1)}', space=vmem, size = 0x200, scoped, tag = 'scoped memory for tpu_custom_call.1']
  %s0 = inlined_call_operand.vmem [shape: f32[128,7], index: 0, kind: input, shape index: {}]
  %s1 = inlined_call_operand.vmem [shape: f32[72,7], index: 1, kind: input, shape index: {}]
  %s2 = inlined_call_operand.vmem [shape: f32[64,32], index: 2, kind: input, shape index: {}]
  %s3 = inlined_call_operand.vmem [shape: f32[64,64], index: 3, kind: input, shape index: {}]
  %s4 = inlined_call_operand.vmem [shape: f32[64,1], index: 4, kind: input, shape index: {}]
  %s5 = inlined_call_operand.vmem [shape: f32[64,1], index: 5, kind: input, shape index: {}]
  %s6 = inlined_call_operand.<no memory space> [shape: f32[1,1], index: 6, kind: input, shape index: {}]
  %s7 = inlined_call_operand.hbm [shape: f32[1,128], index: 7, kind: output, shape index: {}]
  %s8 = sld [smem:[#allocation0]]
  $region38: #{tpu_custom_call.1} parent=0
    _
  %s10 = ssub.s32 1, %s8
  %s11 = scalar_select 0, %s10, %s8
  %v12 = vstv %s6
  %13 = vst [vmem:[#allocation2] sm:$0x1] %v12
  $region1: #{tpu_custom_call.1} parent=0
    #allocation3 [shape = 'u8[512]{0}', space=vmem, size = 0x400, scoped, tag = 'output window, operand 0, single buffered']
    #allocation4 [shape = 's32[1]{0}', space=sflag, size = 0x4, scoped, tag = 'scoped memory for tpu_custom_call.1']
    %14 = vsyncpa [#allocation4], 0
    // Predicated region
    $region2: #{tpu_custom_call.1} parent=1 // pred_check
      _
    $region3: #{tpu_custom_call.1} parent=1 // pred_check_branch
      %16 = sbr.rel (0) target = $region5
    $region4: #{tpu_custom_call.1} parent=1 // pred_region
      _
    $region5: #{tpu_custom_call.1} parent=1 // pred_fallthru
      _
    // Predicated region
    $region6: #{tpu_custom_call.1} parent=1 // pred_check
      _
    $region7: #{tpu_custom_call.1} parent=1 // pred_check_branch
      %18 = sbr.rel (0) target = $region9
    $region8: #{tpu_custom_call.1} parent=1 // pred_region
      _
    $region9: #{tpu_custom_call.1} parent=1 // pred_fallthru
      _
    // Predicated region
    $region10: #{tpu_custom_call.1} parent=1 // pred_check
      _
    $region11: #{tpu_custom_call.1} parent=1 // pred_check_branch
      %20 = sbr.rel (0) target = $region13
    $region12: #{tpu_custom_call.1} parent=1 // pred_region
      _
    $region13: #{tpu_custom_call.1} parent=1 // pred_fallthru
      _
    // Predicated region
    $region14: #{tpu_custom_call.1} parent=1 // pred_check
      _
    $region15: #{tpu_custom_call.1} parent=1 // pred_check_branch
      %22 = sbr.rel (0) target = $region17
    $region16: #{tpu_custom_call.1} parent=1 // pred_region
      _
    $region17: #{tpu_custom_call.1} parent=1 // pred_fallthru
      _
    // Predicated region
    $region18: #{tpu_custom_call.1} parent=1 // pred_check
      _
    $region19: #{tpu_custom_call.1} parent=1 // pred_check_branch
      %24 = sbr.rel (0) target = $region21
    $region20: #{tpu_custom_call.1} parent=1 // pred_region
      _
    $region21: #{tpu_custom_call.1} parent=1 // pred_fallthru
      _
    // Predicated region
    $region22: #{tpu_custom_call.1} parent=1 // pred_check
      _
    $region23: #{tpu_custom_call.1} parent=1 // pred_check_branch
      %26 = sbr.rel (0) target = $region25
    $region24: #{tpu_custom_call.1} parent=1 // pred_region
      _
    $region25: #{tpu_custom_call.1} parent=1 // pred_fallthru
      _
    // Predicated region
    $region26: #{tpu_custom_call.1} parent=1 // pred_check
      _
    $region27: #{tpu_custom_call.1} parent=1 // pred_check_branch
      %28 = sbr.rel (0) target = $region29
    $region28: #{tpu_custom_call.1} parent=1 // pred_region
      _
    $region29: #{tpu_custom_call.1} parent=1 // pred_fallthru
      _
    %v29 = vld [vmem:[%s1] sm:$0xff]
    %v30 = vld [vmem:[%s1 + $0x8] sm:$0xff]
    %v31 = vld [vmem:[%s1 + $0x10] sm:$0xff]
    %v32 = vld [vmem:[%s1 + $0x18] sm:$0xff]
    %v33 = vld [vmem:[%s1 + $0x20] sm:$0xff]
    %v34 = vld [vmem:[%s1 + $0x28] sm:$0xff]
    %v35 = vld [vmem:[%s1 + $0x30] sm:$0xff]
    %v36 = vld [vmem:[%s1 + $0x38] sm:$0xff]
    %v37 = vld [vmem:[%s1 + $0x40] sm:$0xff]
    %v38 = vld [vmem:[%s0] sm:$0xff]
    %v39 = vld [vmem:[%s0 + $0x8] sm:$0xff]
    %v40 = vld [vmem:[%s0 + $0x10] sm:$0xff]
    %v41 = vld [vmem:[%s0 + $0x18] sm:$0xff]
    %v42 = vld [vmem:[%s0 + $0x20] sm:$0xff]
    %v43 = vld [vmem:[%s0 + $0x28] sm:$0xff]
    %v44 = vld [vmem:[%s0 + $0x30] sm:$0xff]
    %v45 = vld [vmem:[%s0 + $0x38] sm:$0xff]
    %v46 = vld [vmem:[%s0 + $0x40] sm:$0xff]
    %v47 = vld [vmem:[%s0 + $0x48] sm:$0xff]
    %v48 = vld [vmem:[%s0 + $0x50] sm:$0xff]
    %v49 = vld [vmem:[%s0 + $0x58] sm:$0xff]
    %v50 = vld [vmem:[%s0 + $0x60] sm:$0xff]
    %v51 = vld [vmem:[%s0 + $0x68] sm:$0xff]
    %v52 = vld [vmem:[%s0 + $0x70] sm:$0xff]
    %v53 = vld [vmem:[%s0 + $0x78] sm:$0xff]
    %vm54 = vcmask 56320
    %v56 = vsel %vm54, %v29, 0
    %v59 = vsel %vm54, %v30, 0
    %v62 = vsel %vm54, %v31, 0
    %v65 = vsel %vm54, %v32, 0
    %v68 = vsel %vm54, %v33, 0
    %v71 = vsel %vm54, %v34, 0
    %v74 = vsel %vm54, %v35, 0
    %v77 = vsel %vm54, %v36, 0
    %v80 = vsel %vm54, %v37, 0
    %v83 = vsel %vm54, %v38, 0
    %v86 = vsel %vm54, %v39, 0
    %v89 = vsel %vm54, %v40, 0
    %v92 = vsel %vm54, %v41, 0
    %v95 = vsel %vm54, %v42, 0
    %v98 = vsel %vm54, %v43, 0
    %v101 = vsel %vm54, %v44, 0
    %v104 = vsel %vm54, %v45, 0
    %v107 = vsel %vm54, %v46, 0
    %v110 = vsel %vm54, %v47, 0
    %v113 = vsel %vm54, %v48, 0
    %v116 = vsel %vm54, %v49, 0
    %v119 = vsel %vm54, %v50, 0
    %v122 = vsel %vm54, %v51, 0
    %v125 = vsel %vm54, %v52, 0
    %v128 = vsel %vm54, %v53, 0
    %130 = vmatprep.subr.mxu0 0.0
    %131 = vmatpush1.xpose.msra.mxu0 %v83
    %132 = vmatprep.subr.mxu0 0.0
    %133 = vmatpush1.xpose.msra.mxu0 %v86
    %134 = vmatprep.subr.mxu0 0.0
    %135 = vmatpush1.xpose.msra.mxu0 %v89
    %136 = vmatprep.subr.mxu0 0.0
    %137 = vmatpush1.xpose.msra.mxu0 %v92
    %138 = vmatprep.subr.mxu0 0.0
    %139 = vmatpush1.xpose.msra.mxu0 %v95
    %140 = vmatprep.subr.mxu0 0.0
    %141 = vmatpush1.xpose.msra.mxu0 %v98
    %142 = vmatprep.subr.mxu0 0.0
    %143 = vmatpush1.xpose.msra.mxu0 %v101
    %144 = vmatprep.subr.mxu0 0.0
    %145 = vmatpush1.xpose.msra.mxu0 %v104
    %146 = vmatprep.subr.mxu0 0.0
    %147 = vmatpush1.xpose.msra.mxu0 %v107
    %148 = vmatprep.subr.mxu0 0.0
    %149 = vmatpush1.xpose.msra.mxu0 %v110
    %150 = vmatprep.subr.mxu0 0.0
    %151 = vmatpush1.xpose.msra.mxu0 %v113
    %152 = vmatprep.subr.mxu0 0.0
    %153 = vmatpush1.xpose.msra.mxu0 %v116
    %154 = vmatprep.subr.mxu0 0.0
    %155 = vmatpush1.xpose.msra.mxu0 %v119
    %156 = vmatprep.subr.mxu0 0.0
    %157 = vmatpush1.xpose.msra.mxu0 %v122
    %158 = vmatprep.subr.mxu0 0.0
    %159 = vmatpush1.xpose.msra.mxu0 %v125
    %160 = vmatprep.subr.mxu0 0.0
    %161 = vmatpush1.xpose.msra.mxu0 %v128
    %162 = vmatprep.subr.mxu0 0.0
    %163 = vmatpush1.xpose.msra.mxu0 0.0
    %164 = vmatprep.subr.mxu0 0.0
    %165 = vmatpush1.xpose.msra.mxu0 0.0
    %166 = vmatprep.subr.mxu0 0.0
    %167 = vmatpush1.xpose.msra.mxu0 0.0
    %168 = vmatprep.subr.mxu0 0.0
    %169 = vmatpush1.xpose.msra.mxu0 0.0
    %170 = vmatprep.subr.mxu0 0.0
    %171 = vmatpush1.xpose.msra.mxu0 0.0
    %172 = vmatprep.subr.mxu0 0.0
    %173 = vmatpush1.xpose.msra.mxu0 0.0
    %174 = vmatprep.subr.mxu0 0.0
    %175 = vmatpush1.xpose.msra.mxu0 0.0
    %176 = vmatprep.subr.mxu0 0.0
    %177 = vmatpush1.xpose.msra.mxu0 0.0
    %178 = vmatprep.subr.mxu0 0.0
    %179 = vmatpush1.xpose.msra.mxu0 0.0
    %180 = vmatprep.subr.mxu0 0.0
    %181 = vmatpush1.xpose.msra.mxu0 0.0
    %182 = vmatprep.subr.mxu0 0.0
    %183 = vmatpush1.xpose.msra.mxu0 0.0
    %184 = vmatprep.subr.mxu0 0.0
    %185 = vmatpush1.xpose.msra.mxu0 0.0
    %186 = vmatprep.subr.mxu0 0.0
    %187 = vmatpush1.xpose.msra.mxu0 0.0
    %188 = vmatprep.subr.mxu0 0.0
    %189 = vmatpush1.xpose.msra.mxu0 0.0
    %190 = vmatprep.subr.mxu0 0.0
    %191 = vmatpush1.xpose.msra.mxu0 0.0
    %192 = vmatprep.subr.mxu0 0.0
    %193 = vmatpush1.xpose.msra.mxu0 0.0
    %194 = vmatprep.mubr.f32.mxu0 0.0
    %195 = vmatmul.mubr.f32.gmra.mrb[0].mxu0 %v56
    %v196 = vpop.f32.mrb[0].mxu0
    %v197 = vadd.f32 0.0, %v196
    %v198 = vpop.f32.mrb[0].mxu0
    %199 = vmatprep.mubr.f32.mxu0 0.0
    %200 = vmatmul.mubr.f32.gmra.mrb[0].mxu0 %v59
    %v201 = vpop.f32.mrb[0].mxu0
    %v202 = vadd.f32 0.0, %v201
    %v203 = vpop.f32.mrb[0].mxu0
    %204 = vmatprep.mubr.f32.mxu0 0.0
    %205 = vmatmul.mubr.f32.gmra.mrb[0].mxu0 %v62
    %v206 = vpop.f32.mrb[0].mxu0
    %v207 = vadd.f32 0.0, %v206
    %v208 = vpop.f32.mrb[0].mxu0
    %209 = vmatprep.mubr.f32.mxu0 0.0
    %210 = vmatmul.mubr.f32.gmra.mrb[0].mxu0 %v65
    %v211 = vpop.f32.mrb[0].mxu0
    %v212 = vadd.f32 0.0, %v211
    %v213 = vpop.f32.mrb[0].mxu0
    %214 = vmatprep.mubr.f32.mxu0 0.0
    %215 = vmatmul.mubr.f32.gmra.mrb[0].mxu0 %v68
    %v216 = vpop.f32.mrb[0].mxu0
    %v217 = vadd.f32 0.0, %v216
    %v218 = vpop.f32.mrb[0].mxu0
    %219 = vmatprep.mubr.f32.mxu0 0.0
    %220 = vmatmul.mubr.f32.gmra.mrb[0].mxu0 %v71
    %v221 = vpop.f32.mrb[0].mxu0
    %v222 = vadd.f32 0.0, %v221
    %v223 = vpop.f32.mrb[0].mxu0
    %224 = vmatprep.mubr.f32.mxu0 0.0
    %225 = vmatmul.mubr.f32.gmra.mrb[0].mxu0 %v74
    %v226 = vpop.f32.mrb[0].mxu0
    %v227 = vadd.f32 0.0, %v226
    %v228 = vpop.f32.mrb[0].mxu0
    %229 = vmatprep.mubr.f32.mxu0 0.0
    %230 = vmatmul.mubr.f32.gmra.mrb[0].mxu0 %v77
    %v231 = vpop.f32.mrb[0].mxu0
    %v232 = vadd.f32 0.0, %v231
    %v233 = vpop.f32.mrb[0].mxu0
    %234 = vmatprep.mubr.f32.mxu0 0.0
    %235 = vmatmul.mubr.f32.gmra.mrb[0].mxu0 %v80
    %v236 = vpop.f32.mrb[0].mxu0
    %v237 = vadd.f32 0.0, %v236
    %v238 = vpop.f32.mrb[0].mxu0
    %239 = vdwg.mxu0
    %v240 = vadd.f32 %v237, 0.001
    %v241 = vcvt.f32.s32.to.zero.pseudo %v240
    %v242 = vlaneseq
    %v243 = vshrl.u32 %v242, 7
    %v244 = vadd.s32 %v243, 8
    %v245 = vadd.s32 %v243, 16
    %v246 = vadd.s32 %v243, 24
    %vm247 = vcmp.lt.s32.totalorder %v243, 24
    %vm248 = vcmp.lt.s32.totalorder %v244, 24
    %vm249 = vcmp.lt.s32.totalorder %v245, 24
    %vm250 = vcmp.lt.s32.totalorder %v246, 24
    %v251 = vadd.s32 %v241, 24
    %v252 = vlaneseq
    %v253 = vshrl.u32 %v252, 7
    %v254 = vsub.s32 0, %v253
    %v255 = vrot.slane %v241, %v254
    %v256 = vlaneseq
    %v257 = vshrl.u32 %v256, 7
    %v258 = vsub.s32 1, %v257
    %v259 = vrot.slane %v251, %v258
    %v260 = vsel %vm247, %v255, %v259
    %v261 = vsel %vm248, %v255, %v259
    %v262 = vsel %vm249, %v255, %v259
    %v263 = vsel %vm250, %v255, %v259
    %vm264 = vcmp.eq.s32.totalorder %v243, %v260
    %vm265 = vcmp.eq.s32.totalorder %v244, %v261
    %vm266 = vcmp.eq.s32.totalorder %v245, %v262
    %vm267 = vcmp.eq.s32.totalorder %v246, %v263
    %v268 = vsel %vm264, 1, 0
    %v269 = vsel %vm265, 1, 0
    %v270 = vsel %vm266, 1, 0
    %v271 = vsel %vm267, 1, 0
    %v272 = vcvt.s32.f32 %v268
    %v273 = vcvt.s32.f32 %v269
    %v274 = vcvt.s32.f32 %v270
    %v275 = vcvt.s32.f32 %v271
    %v276 = vld [vmem:[%s2] sm:$0xff]
    %v277 = vld [vmem:[%s2 + $0x8] sm:$0xff]
    %v278 = vld [vmem:[%s2 + $0x10] sm:$0xff]
    %v279 = vld [vmem:[%s2 + $0x18] sm:$0xff]
    %v280 = vld [vmem:[%s2 + $0x20] sm:$0xff]
    %v281 = vld [vmem:[%s2 + $0x28] sm:$0xff]
    %v282 = vld [vmem:[%s2 + $0x30] sm:$0xff]
    %v283 = vld [vmem:[%s2 + $0x38] sm:$0xff]
    %vm284 = vcmask 261120
    %v286 = vsel %vm284, %v276, 0
    %v289 = vsel %vm284, %v277, 0
    %v292 = vsel %vm284, %v278, 0
    %v295 = vsel %vm284, %v279, 0
    %v298 = vsel %vm284, %v280, 0
    %v301 = vsel %vm284, %v281, 0
    %v304 = vsel %vm284, %v282, 0
    %v307 = vsel %vm284, %v283, 0
    %309 = vmatprep.subr.mxu0 0.0
    %310 = vmatpush1.msra.mxu0 %v272
    %311 = vmatprep.subr.mxu0 0.0
    %312 = vmatpush1.msra.mxu0 %v273
    %313 = vmatprep.subr.mxu0 0.0
    %314 = vmatpush1.msra.mxu0 %v274
    %315 = vmatprep.subr.mxu0 0.0
    %316 = vmatpush1.msra.mxu0 %v275
    %317 = vmatprep.subr.mxu0 0.0
    %318 = vmatpush1.msra.mxu0 0.0
    %319 = vmatprep.subr.mxu0 0.0
    %320 = vmatpush1.msra.mxu0 0.0
    %321 = vmatprep.subr.mxu0 0.0
    %322 = vmatpush1.msra.mxu0 0.0
    %323 = vmatprep.subr.mxu0 0.0
    %324 = vmatpush1.msra.mxu0 0.0
    %325 = vmatprep.subr.mxu0 0.0
    %326 = vmatpush1.msra.mxu0 0.0
    %327 = vmatprep.subr.mxu0 0.0
    %328 = vmatpush1.msra.mxu0 0.0
    %329 = vmatprep.subr.mxu0 0.0
    %330 = vmatpush1.msra.mxu0 0.0
    %331 = vmatprep.subr.mxu0 0.0
    %332 = vmatpush1.msra.mxu0 0.0
    %333 = vmatprep.subr.mxu0 0.0
    %334 = vmatpush1.msra.mxu0 0.0
    %335 = vmatprep.subr.mxu0 0.0
    %336 = vmatpush1.msra.mxu0 0.0
    %337 = vmatprep.subr.mxu0 0.0
    %338 = vmatpush1.msra.mxu0 0.0
    %339 = vmatprep.subr.mxu0 0.0
    %340 = vmatpush1.msra.mxu0 0.0
    %341 = vmatprep.subr.mxu0 0.0
    %342 = vmatpush1.msra.mxu0 0.0
    %343 = vmatprep.subr.mxu0 0.0
    %344 = vmatpush1.msra.mxu0 0.0
    %345 = vmatprep.subr.mxu0 0.0
    %346 = vmatpush1.msra.mxu0 0.0
    %347 = vmatprep.subr.mxu0 0.0
    %348 = vmatpush1.msra.mxu0 0.0
    %349 = vmatprep.subr.mxu0 0.0
    %350 = vmatpush1.msra.mxu0 0.0
    %351 = vmatprep.subr.mxu0 0.0
    %352 = vmatpush1.msra.mxu0 0.0
    %353 = vmatprep.subr.mxu0 0.0
    %354 = vmatpush1.msra.mxu0 0.0
    %355 = vmatprep.subr.mxu0 0.0
    %356 = vmatpush1.msra.mxu0 0.0
    %357 = vmatprep.subr.mxu0 0.0
    %358 = vmatpush1.msra.mxu0 0.0
    %359 = vmatprep.subr.mxu0 0.0
    %360 = vmatpush1.msra.mxu0 0.0
    %361 = vmatprep.subr.mxu0 0.0
    %362 = vmatpush1.msra.mxu0 0.0
    %363 = vmatprep.subr.mxu0 0.0
    %364 = vmatpush1.msra.mxu0 0.0
    %365 = vmatprep.subr.mxu0 0.0
    %366 = vmatpush1.msra.mxu0 0.0
    %367 = vmatprep.subr.mxu0 0.0
    %368 = vmatpush1.msra.mxu0 0.0
    %369 = vmatprep.subr.mxu0 0.0
    %370 = vmatpush1.msra.mxu0 0.0
    %371 = vmatprep.subr.mxu0 0.0
    %372 = vmatpush1.msra.mxu0 0.0
    %373 = vmatprep.mubr.f32.mxu0 0.0
    %374 = vmatmul.mubr.f32.gmra.mrb[0].mxu0 %v286
    %v375 = vpop.f32.mrb[0].mxu0
    %v376 = vadd.f32 %v197, %v375
    %v377 = vpop.f32.mrb[0].mxu0
    %378 = vmatprep.mubr.f32.mxu0 0.0
    %379 = vmatmul.mubr.f32.gmra.mrb[0].mxu0 %v289
    %v380 = vpop.f32.mrb[0].mxu0
    %v381 = vadd.f32 %v202, %v380
    %v382 = vpop.f32.mrb[0].mxu0
    %383 = vmatprep.mubr.f32.mxu0 0.0
    %384 = vmatmul.mubr.f32.gmra.mrb[0].mxu0 %v292
    %v385 = vpop.f32.mrb[0].mxu0
    %v386 = vadd.f32 %v207, %v385
    %v387 = vpop.f32.mrb[0].mxu0
    %388 = vmatprep.mubr.f32.mxu0 0.0
    %389 = vmatmul.mubr.f32.gmra.mrb[0].mxu0 %v295
    %v390 = vpop.f32.mrb[0].mxu0
    %v391 = vadd.f32 %v212, %v390
    %v392 = vpop.f32.mrb[0].mxu0
    %393 = vmatprep.mubr.f32.mxu0 0.0
    %394 = vmatmul.mubr.f32.gmra.mrb[0].mxu0 %v298
    %v395 = vpop.f32.mrb[0].mxu0
    %v396 = vadd.f32 %v217, %v395
    %v397 = vpop.f32.mrb[0].mxu0
    %398 = vmatprep.mubr.f32.mxu0 0.0
    %399 = vmatmul.mubr.f32.gmra.mrb[0].mxu0 %v301
    %v400 = vpop.f32.mrb[0].mxu0
    %v401 = vadd.f32 %v222, %v400
    %v402 = vpop.f32.mrb[0].mxu0
    %403 = vmatprep.mubr.f32.mxu0 0.0
    %404 = vmatmul.mubr.f32.gmra.mrb[0].mxu0 %v304
    %v405 = vpop.f32.mrb[0].mxu0
    %v406 = vadd.f32 %v227, %v405
    %v407 = vpop.f32.mrb[0].mxu0
    %408 = vmatprep.mubr.f32.mxu0 0.0
    %409 = vmatmul.mubr.f32.gmra.mrb[0].mxu0 %v307
    %v410 = vpop.f32.mrb[0].mxu0
    %v411 = vadd.f32 %v232, %v410
    %v412 = vpop.f32.mrb[0].mxu0
    %413 = vdwg.mxu0
    %v414 = vmax.f32 %v376, 0.0
    %v415 = vmax.f32 %v381, 0.0
    %v416 = vmax.f32 %v386, 0.0
    %v417 = vmax.f32 %v391, 0.0
    %v418 = vmax.f32 %v396, 0.0
    %v419 = vmax.f32 %v401, 0.0
    %v420 = vmax.f32 %v406, 0.0
    %v421 = vmax.f32 %v411, 0.0
    %v422 = vld [vmem:[%s3] sm:$0xff]
    %v423 = vld [vmem:[%s3 + $0x8] sm:$0xff]
    %v424 = vld [vmem:[%s3 + $0x10] sm:$0xff]
    %v425 = vld [vmem:[%s3 + $0x18] sm:$0xff]
    %v426 = vld [vmem:[%s3 + $0x20] sm:$0xff]
    %v427 = vld [vmem:[%s3 + $0x28] sm:$0xff]
    %v428 = vld [vmem:[%s3 + $0x30] sm:$0xff]
    %v429 = vld [vmem:[%s3 + $0x38] sm:$0xff]
    %v430 = vld [vmem:[%s4] sm:$0xff]
    %v431 = vld [vmem:[%s4 + $0x8] sm:$0xff]
    %v432 = vld [vmem:[%s4 + $0x10] sm:$0xff]
    %v433 = vld [vmem:[%s4 + $0x18] sm:$0xff]
    %v434 = vld [vmem:[%s4 + $0x20] sm:$0xff]
    %v435 = vld [vmem:[%s4 + $0x28] sm:$0xff]
    %v436 = vld [vmem:[%s4 + $0x30] sm:$0xff]
    %v437 = vld [vmem:[%s4 + $0x38] sm:$0xff]
    %439 = vset.pattern.permute.xlu0 0
    %440 = vperm.xlu0 %439, %v430
    %v441 = vpop.permute.xlu0 %440
    %444 = vset.pattern.permute.xlu0 0
    %445 = vperm.xlu0 %444, %v431
    %v446 = vpop.permute.xlu0 %445
    %449 = vset.pattern.permute.xlu0 0
    %450 = vperm.xlu0 %449, %v432
    %v451 = vpop.permute.xlu0 %450
    %454 = vset.pattern.permute.xlu0 0
    %455 = vperm.xlu0 %454, %v433
    %v456 = vpop.permute.xlu0 %455
    %459 = vset.pattern.permute.xlu0 0
    %460 = vperm.xlu0 %459, %v434
    %v461 = vpop.permute.xlu0 %460
    %464 = vset.pattern.permute.xlu0 0
    %465 = vperm.xlu0 %464, %v435
    %v466 = vpop.permute.xlu0 %465
    %469 = vset.pattern.permute.xlu0 0
    %470 = vperm.xlu0 %469, %v436
    %v471 = vpop.permute.xlu0 %470
    %474 = vset.pattern.permute.xlu0 0
    %475 = vperm.xlu0 %474, %v437
    %v476 = vpop.permute.xlu0 %475
    %vm478 = vcmask 523264
    %v480 = vsel %vm478, %v422, 0
    %v483 = vsel %vm478, %v423, 0
    %v486 = vsel %vm478, %v424, 0
    %v489 = vsel %vm478, %v425, 0
    %v492 = vsel %vm478, %v426, 0
    %v495 = vsel %vm478, %v427, 0
    %v498 = vsel %vm478, %v428, 0
    %v501 = vsel %vm478, %v429, 0
    %503 = vmatprep.subr.mxu0 0.0
    %504 = vmatpush1.msra.mxu0 %v414
    %505 = vmatprep.subr.mxu0 0.0
    %506 = vmatpush1.msra.mxu0 %v415
    %507 = vmatprep.subr.mxu0 0.0
    %508 = vmatpush1.msra.mxu0 %v416
    %509 = vmatprep.subr.mxu0 0.0
    %510 = vmatpush1.msra.mxu0 %v417
    %511 = vmatprep.subr.mxu0 0.0
    %512 = vmatpush1.msra.mxu0 %v418
    %513 = vmatprep.subr.mxu0 0.0
    %514 = vmatpush1.msra.mxu0 %v419
    %515 = vmatprep.subr.mxu0 0.0
    %516 = vmatpush1.msra.mxu0 %v420
    %517 = vmatprep.subr.mxu0 0.0
    %518 = vmatpush1.msra.mxu0 %v421
    %519 = vmatprep.subr.mxu0 0.0
    %520 = vmatpush1.msra.mxu0 0.0
    %521 = vmatprep.subr.mxu0 0.0
    %522 = vmatpush1.msra.mxu0 0.0
    %523 = vmatprep.subr.mxu0 0.0
    %524 = vmatpush1.msra.mxu0 0.0
    %525 = vmatprep.subr.mxu0 0.0
    %526 = vmatpush1.msra.mxu0 0.0
    %527 = vmatprep.subr.mxu0 0.0
    %528 = vmatpush1.msra.mxu0 0.0
    %529 = vmatprep.subr.mxu0 0.0
    %530 = vmatpush1.msra.mxu0 0.0
    %531 = vmatprep.subr.mxu0 0.0
    %532 = vmatpush1.msra.mxu0 0.0
    %533 = vmatprep.subr.mxu0 0.0
    %534 = vmatpush1.msra.mxu0 0.0
    %535 = vmatprep.subr.mxu0 0.0
    %536 = vmatpush1.msra.mxu0 0.0
    %537 = vmatprep.subr.mxu0 0.0
    %538 = vmatpush1.msra.mxu0 0.0
    %539 = vmatprep.subr.mxu0 0.0
    %540 = vmatpush1.msra.mxu0 0.0
    %541 = vmatprep.subr.mxu0 0.0
    %542 = vmatpush1.msra.mxu0 0.0
    %543 = vmatprep.subr.mxu0 0.0
    %544 = vmatpush1.msra.mxu0 0.0
    %545 = vmatprep.subr.mxu0 0.0
    %546 = vmatpush1.msra.mxu0 0.0
    %547 = vmatprep.subr.mxu0 0.0
    %548 = vmatpush1.msra.mxu0 0.0
    %549 = vmatprep.subr.mxu0 0.0
    %550 = vmatpush1.msra.mxu0 0.0
    %551 = vmatprep.subr.mxu0 0.0
    %552 = vmatpush1.msra.mxu0 0.0
    %553 = vmatprep.subr.mxu0 0.0
    %554 = vmatpush1.msra.mxu0 0.0
    %555 = vmatprep.subr.mxu0 0.0
    %556 = vmatpush1.msra.mxu0 0.0
    %557 = vmatprep.subr.mxu0 0.0
    %558 = vmatpush1.msra.mxu0 0.0
    %559 = vmatprep.subr.mxu0 0.0
    %560 = vmatpush1.msra.mxu0 0.0
    %561 = vmatprep.subr.mxu0 0.0
    %562 = vmatpush1.msra.mxu0 0.0
    %563 = vmatprep.subr.mxu0 0.0
    %564 = vmatpush1.msra.mxu0 0.0
    %565 = vmatprep.subr.mxu0 0.0
    %566 = vmatpush1.msra.mxu0 0.0
    %567 = vmatprep.mubr.f32.mxu0 0.0
    %568 = vmatmul.mubr.f32.gmra.mrb[0].mxu0 %v480
    %v569 = vpop.f32.mrb[0].mxu0
    %v570 = vadd.f32 %v441, %v569
    %v571 = vpop.f32.mrb[0].mxu0
    %572 = vmatprep.mubr.f32.mxu0 0.0
    %573 = vmatmul.mubr.f32.gmra.mrb[0].mxu0 %v483
    %v574 = vpop.f32.mrb[0].mxu0
    %v575 = vadd.f32 %v446, %v574
    %v576 = vpop.f32.mrb[0].mxu0
    %577 = vmatprep.mubr.f32.mxu0 0.0
    %578 = vmatmul.mubr.f32.gmra.mrb[0].mxu0 %v486
    %v579 = vpop.f32.mrb[0].mxu0
    %v580 = vadd.f32 %v451, %v579
    %v581 = vpop.f32.mrb[0].mxu0
    %582 = vmatprep.mubr.f32.mxu0 0.0
    %583 = vmatmul.mubr.f32.gmra.mrb[0].mxu0 %v489
    %v584 = vpop.f32.mrb[0].mxu0
    %v585 = vadd.f32 %v456, %v584
    %v586 = vpop.f32.mrb[0].mxu0
    %587 = vmatprep.mubr.f32.mxu0 0.0
    %588 = vmatmul.mubr.f32.gmra.mrb[0].mxu0 %v492
    %v589 = vpop.f32.mrb[0].mxu0
    %v590 = vadd.f32 %v461, %v589
    %v591 = vpop.f32.mrb[0].mxu0
    %592 = vmatprep.mubr.f32.mxu0 0.0
    %593 = vmatmul.mubr.f32.gmra.mrb[0].mxu0 %v495
    %v594 = vpop.f32.mrb[0].mxu0
    %v595 = vadd.f32 %v466, %v594
    %v596 = vpop.f32.mrb[0].mxu0
    %597 = vmatprep.mubr.f32.mxu0 0.0
    %598 = vmatmul.mubr.f32.gmra.mrb[0].mxu0 %v498
    %v599 = vpop.f32.mrb[0].mxu0
    %v600 = vadd.f32 %v471, %v599
    %v601 = vpop.f32.mrb[0].mxu0
    %602 = vmatprep.mubr.f32.mxu0 0.0
    %603 = vmatmul.mubr.f32.gmra.mrb[0].mxu0 %v501
    %v604 = vpop.f32.mrb[0].mxu0
    %v605 = vadd.f32 %v476, %v604
    %v606 = vpop.f32.mrb[0].mxu0
    %607 = vdwg.mxu0
    %v608 = vmax.f32 %v570, 0.0
    %v609 = vmax.f32 %v575, 0.0
    %v610 = vmax.f32 %v580, 0.0
    %v611 = vmax.f32 %v585, 0.0
    %v612 = vmax.f32 %v590, 0.0
    %v613 = vmax.f32 %v595, 0.0
    %v614 = vmax.f32 %v600, 0.0
    %v615 = vmax.f32 %v605, 0.0
    %v616 = vld [vmem:[%s5] sm:$0xff]
    %v617 = vld [vmem:[%s5 + $0x8] sm:$0xff]
    %v618 = vld [vmem:[%s5 + $0x10] sm:$0xff]
    %v619 = vld [vmem:[%s5 + $0x18] sm:$0xff]
    %v620 = vld [vmem:[%s5 + $0x20] sm:$0xff]
    %v621 = vld [vmem:[%s5 + $0x28] sm:$0xff]
    %v622 = vld [vmem:[%s5 + $0x30] sm:$0xff]
    %v623 = vld [vmem:[%s5 + $0x38] sm:$0xff]
    %625 = vset.pattern.permute.xlu0 0
    %626 = vperm.xlu0 %625, %v616
    %v627 = vpop.permute.xlu0 %626
    %630 = vset.pattern.permute.xlu0 0
    %631 = vperm.xlu0 %630, %v617
    %v632 = vpop.permute.xlu0 %631
    %635 = vset.pattern.permute.xlu0 0
    %636 = vperm.xlu0 %635, %v618
    %v637 = vpop.permute.xlu0 %636
    %640 = vset.pattern.permute.xlu0 0
    %641 = vperm.xlu0 %640, %v619
    %v642 = vpop.permute.xlu0 %641
    %645 = vset.pattern.permute.xlu0 0
    %646 = vperm.xlu0 %645, %v620
    %v647 = vpop.permute.xlu0 %646
    %650 = vset.pattern.permute.xlu0 0
    %651 = vperm.xlu0 %650, %v621
    %v652 = vpop.permute.xlu0 %651
    %655 = vset.pattern.permute.xlu0 0
    %656 = vperm.xlu0 %655, %v622
    %v657 = vpop.permute.xlu0 %656
    %660 = vset.pattern.permute.xlu0 0
    %661 = vperm.xlu0 %660, %v623
    %v662 = vpop.permute.xlu0 %661
    %v664 = vmul.f32 %v608, %v627
    %v665 = vmul.f32 %v609, %v632
    %v666 = vmul.f32 %v610, %v637
    %v667 = vmul.f32 %v611, %v642
    %v668 = vmul.f32 %v612, %v647
    %v669 = vmul.f32 %v613, %v652
    %v670 = vmul.f32 %v614, %v657
    %v671 = vmul.f32 %v615, %v662
    %v672 = vadd.f32 %v664, %v665
    %v673 = vadd.f32 %v672, %v666
    %v674 = vadd.f32 %v673, %v667
    %v675 = vadd.f32 %v674, %v668
    %v676 = vadd.f32 %v675, %v669
    %v677 = vadd.f32 %v676, %v670
    %v678 = vadd.f32 %v677, %v671
    %v679 = vrot.slane %v678, 4
    %v680 = vadd.f32 %v678, %v679
    %v681 = vrot.slane %v680, 2
    %v682 = vadd.f32 %v680, %v681
    %v683 = vrot.slane %v682, 1
    %v684 = vadd.f32 %v682, %v683
    %v685 = vld [vmem:[#allocation2] sm:$0x1]
    %687 = vset.pattern.permute.xlu0 0
    %688 = vperm.xlu0 %687, %v685
    %v689 = vpop.permute.xlu0 %688
    %v691 = vlaneseq
    %v692 = vshrl.u32 %v691, 7
    %v693 = vsub.s32 0, %v692
    %v694 = vrot.slane %v689, %v693
    %v695 = vadd.f32 %v684, %v694
    %696 = vst [vmem:[#allocation3] sm:$0x1] %v695
    // Predicated region
    $region30: #{tpu_custom_call.1} parent=1 // pred_check
      _
    $region31: #{tpu_custom_call.1} parent=1 // pred_check_branch
      %698 = sbr.rel (0) target = $region33
    $region32: #{tpu_custom_call.1} parent=1 // pred_region
      %s700 = ssub.s32 16, 16
      %701 = vsyncadd [#allocation4], %s700
      %s703 = sshll.u32 [#allocation3], 4
      %s704 = int_to_ptr.vmem [resolvable:$true] %s703
      %706 = dma.vmem_to_hbm [thread:$0]  %s704, 16, %s7, [#allocation4]
    $region33: #{tpu_custom_call.1} parent=1 // pred_fallthru
      _
    // Predicated region
    $region34: #{tpu_custom_call.1} parent=1 // pred_check
      _
    $region35: #{tpu_custom_call.1} parent=1 // pred_check_branch
      %708 = sbr.rel (0) target = $region37
    $region36: #{tpu_custom_call.1} parent=1 // pred_region
      %709 = dma.done [#allocation4], 16
    $region37: #{tpu_custom_call.1} parent=1 // pred_fallthru
      _
    %710 = vsyncpa [#allocation4], 1

</llo_original>
